<compile_context>
chip_gen: v7x
topology: tpu7x:2x2x1
jax: 0.10.0
libtpu: 0.0.40
codegen_flags: <defaults>
</compile_context>

<pallas_src>
import math
from functools import partial

import jax
import jax.numpy as jnp
from jax import lax
from jax.experimental import pallas as pl
from jax.experimental.pallas import tpu as pltpu


def calculate_conv1d_padding(stride, kernel_size, d_in, d_out, dilation=1):
    padding = math.ceil((stride * (d_out - 1) - d_in + dilation * (kernel_size - 1) + 1) / 2)
    assert padding >= 0, 'Padding value must be greater than or equal to 0.'
    return padding


# ------------------------------ fused kernel ---------------------------------

def resblock1d_kernel(x_ref, w1_ref, b1_ref, w2_ref, b2_ref, out_ref, *,
                      ksize, pad, dil, cmid):
    """One batch element: x (C, L) -> x + relu(bn2(conv2(relu(bn1(conv1(x))))))."""
    x = x_ref[0]                                         # (C, L)
    C, L = x.shape

    # conv1 (kernel_size=1) + folded BN1 + ReLU  ==  one MXU matmul.
    h = jnp.dot(w1_ref[...], x, preferred_element_type=jnp.float32) + b1_ref[...]
    h = jnp.maximum(h, 0.0)                              # (Cmid, L)

    # conv2 (kernel_size=k, padding=pad, dilation=dil, stride=1) + folded BN2 + ReLU.
    # Zero-pad along L, then stack the k shifted views along the channel axis so the
    # whole convolution is a single matmul with contraction dim k*Cmid.
    if pad > 0:
        zpad = jnp.zeros((cmid, pad), jnp.float32)
        h_pad = jnp.concatenate([zpad, h, zpad], axis=1)  # (Cmid, L + 2*pad)
    else:
        h_pad = h

    if ksize > 1:
        h_stack = jnp.concatenate(
            [h_pad[:, t * dil:t * dil + L] for t in range(ksize)], axis=0)  # (k*Cmid, L)
    else:
        h_stack = h_pad[:, :L]

    y = jnp.dot(w2_ref[...], h_stack, preferred_element_type=jnp.float32) + b2_ref[...]
    y = jnp.maximum(y, 0.0)                              # (C, L)

    # Residual; DropPath is identity in eval mode.
    out_ref[0] = x + y


# ------------------------------ wrapper ---------------------------------------

def resblock1d(x, params, *, kernel_size=3, stride=1, dilation=1):
    B, C, L = x.shape
    Cmid = C // 2
    eps = 1e-5
    # TODO(synk): stride > 1 changes the conv2 output length, which breaks the residual
    # add in the original module as well; only stride=1 is supported here.
    assert stride == 1
    pad = calculate_conv1d_padding(stride, kernel_size, L, L, dilation)
    out_len = L + 2 * pad - dilation * (kernel_size - 1)
    assert out_len == L, "residual requires conv2 to preserve the length"

    # Fold eval-mode BatchNorm and conv biases into effective conv weights/biases
    # (one-time parameter preprocessing, numerically identical to conv -> BN at eval).
    s1 = params["bn1_gamma"] / jnp.sqrt(params["bn1_var"] + eps)
    w1_eff = (params["conv1_w"][:, :, 0] * s1[:, None]).astype(jnp.float32)        # (Cmid, C)
    b1_eff = ((params["conv1_b"] - params["bn1_mean"]) * s1
              + params["bn1_beta"])[:, None].astype(jnp.float32)                   # (Cmid, 1)

    s2 = params["bn2_gamma"] / jnp.sqrt(params["bn2_var"] + eps)
    w2_eff = params["conv2_w"] * s2[:, None, None]                                 # (C, Cmid, K)
    # Tap-major flatten so column t*Cmid + c_in matches row t*Cmid + c_in of h_stack.
    w2_eff = jnp.transpose(w2_eff, (0, 2, 1)).reshape(C, kernel_size * Cmid)
    w2_eff = w2_eff.astype(jnp.float32)                                            # (C, K*Cmid)
    b2_eff = ((params["conv2_b"] - params["bn2_mean"]) * s2
              + params["bn2_beta"])[:, None].astype(jnp.float32)                   # (C, 1)

    kern = partial(resblock1d_kernel, ksize=kernel_size, pad=pad, dil=dilation, cmid=Cmid)
    return pl.pallas_call(
        kern,
        out_shape=jax.ShapeDtypeStruct((B, C, L), jnp.float32),
        grid=(B,),
        in_specs=[
            pl.BlockSpec((1, C, L), lambda b: (b, 0, 0)),                 # x (per batch)
            pl.BlockSpec((Cmid, C), lambda b: (0, 0)),                    # W1 (BN folded)
            pl.BlockSpec((Cmid, 1), lambda b: (0, 0)),                    # b1 (BN folded)
            pl.BlockSpec((C, kernel_size * Cmid), lambda b: (0, 0)),      # W2 (folded, tap-major)
            pl.BlockSpec((C, 1), lambda b: (0, 0)),                       # b2 (BN folded)
        ],
        out_specs=pl.BlockSpec((1, C, L), lambda b: (b, 0, 0)),
        compiler_params=pltpu.CompilerParams(dimension_semantics=("parallel",)),
    )(x, w1_eff, b1_eff, w2_eff, b2_eff)


# ------------------------- pure-JAX reference (for check) ---------------------

def _conv_bn_relu_ref(x, w, b, gamma, beta, mean, var, pad, stride=1, dilation=1):
    y = lax.conv_general_dilated(
        x, w, window_strides=(stride,), padding=[(pad, pad)], rhs_dilation=(dilation,),
        dimension_numbers=('NCH', 'OIH', 'NCH'))
    y = y + b[None, :, None]
    y = ((y - mean[None, :, None]) * (gamma / jnp.sqrt(var + 1e-5))[None, :, None]
         + beta[None, :, None])
    return jnp.maximum(y, 0.0)


def resblock1d_ref(x, p, *, kernel_size=3, stride=1, dilation=1):
    L = x.shape[-1]
    pad = calculate_conv1d_padding(stride, kernel_size, L, L, dilation)
    h = _conv_bn_relu_ref(x, p["conv1_w"], p["conv1_b"], p["bn1_gamma"], p["bn1_beta"],
                          p["bn1_mean"], p["bn1_var"], pad=0)
    y = _conv_bn_relu_ref(h, p["conv2_w"], p["conv2_b"], p["bn2_gamma"], p["bn2_beta"],
                          p["bn2_mean"], p["bn2_var"], pad=pad, stride=stride, dilation=dilation)
    return x + y


# ------------------------------- params / main --------------------------------

def init_params(key, C, K):
    Cmid = C // 2
    ks = jax.random.split(key, 10)

    def nrm(k, shape, scale=0.2):
        return (scale * jax.random.normal(k, shape)).astype(jnp.float32)

    return dict(
        conv1_w=nrm(ks[0], (Cmid, C, 1)),
        conv1_b=nrm(ks[1], (Cmid,)),
        bn1_gamma=(1.0 + 0.1 * jax.random.normal(ks[2], (Cmid,))).astype(jnp.float32),
        bn1_beta=nrm(ks[3], (Cmid,), 0.1),
        bn1_mean=nrm(ks[4], (Cmid,), 0.1),
        bn1_var=jax.random.uniform(ks[5], (Cmid,), minval=0.5, maxval=1.5).astype(jnp.float32),
        conv2_w=nrm(ks[6], (C, Cmid, K)),
        conv2_b=nrm(ks[7], (C,)),
        bn2_gamma=(1.0 + 0.1 * jax.random.normal(ks[8], (C,))).astype(jnp.float32),
        bn2_beta=nrm(ks[9], (C,), 0.1),
        bn2_mean=nrm(ks[4], (C,), 0.1),
        bn2_var=jax.random.uniform(ks[5], (C,), minval=0.5, maxval=1.5).astype(jnp.float32),
    )


if __name__ == "__main__":
    # x is [batch, in_channel, in_dim]; defaults kernel_size=3, stride=1, dilation=1.
    # L = 128 keeps the kernel's last dim lane-dense (full 128-lane stores).
    B, C, L = 2, 16, 128
    K = 3

    key = jax.random.PRNGKey(0)
    kx, kp = jax.random.split(key)
    x = jax.random.normal(kx, (B, C, L), dtype=jnp.float32)
    params = init_params(kp, C, K)

    out = resblock1d(x, params, kernel_size=K)
    out = jax.block_until_ready(out)

    ref = resblock1d_ref(x, params, kernel_size=K)

    assert out.shape == (B, C, L), out.shape
    assert bool(jnp.all(jnp.isfinite(out)))
    assert bool(jnp.allclose(out, ref, rtol=1e-4, atol=1e-4)), float(jnp.max(jnp.abs(out - ref)))
    print("KERNEL_OK")
</pallas_src>

<mosaic_0001>
module attributes {stable_mosaic.version = 11 : i64} {
  func.func @resblock1d_kernel(%arg0: i32, %arg1: memref<1x16x128xf32, #tpu.memory_space<vmem>>, %arg2: memref<8x16xf32, #tpu.memory_space<vmem>>, %arg3: memref<8x1xf32, #tpu.memory_space<vmem>>, %arg4: memref<16x24xf32, #tpu.memory_space<vmem>>, %arg5: memref<16x1xf32, #tpu.memory_space<vmem>>, %arg6: memref<1x16x128xf32, #tpu.memory_space<vmem>>) attributes {dimension_semantics = [#tpu.dimension_semantics<parallel>], iteration_bounds = array<i64: 2>, scalar_prefetch = 0 : i64, scratch_operands = 0 : i64, tpu.core_type = #tpu.core_type<tc>, window_params = [{transform_indices = @transform_0, window_bounds = array<i64: 1, 16, 128>}, {pipeline_mode = #tpu.pipeline_mode<synchronous>, transform_indices = @transform_1, window_bounds = array<i64: 8, 16>}, {pipeline_mode = #tpu.pipeline_mode<synchronous>, transform_indices = @transform_2, window_bounds = array<i64: 8, 1>}, {pipeline_mode = #tpu.pipeline_mode<synchronous>, transform_indices = @transform_3, window_bounds = array<i64: 16, 24>}, {pipeline_mode = #tpu.pipeline_mode<synchronous>, transform_indices = @transform_4, window_bounds = array<i64: 16, 1>}, {transform_indices = @transform_5, window_bounds = array<i64: 1, 16, 128>}]} {
    %c0 = arith.constant 0 : index
    %c0_0 = arith.constant 0 : index
    %c0_1 = arith.constant 0 : index
    %0 = vector.load %arg1[%c0, %c0_0, %c0_1] : memref<1x16x128xf32, #tpu.memory_space<vmem>>, vector<1x16x128xf32>
    %1 = vector.shape_cast %0 : vector<1x16x128xf32> to vector<16x128xf32>
    %c0_2 = arith.constant 0 : index
    %c0_3 = arith.constant 0 : index
    %2 = vector.load %arg2[%c0_2, %c0_3] : memref<8x16xf32, #tpu.memory_space<vmem>>, vector<8x16xf32>
    %cst = arith.constant dense<0.000000e+00> : vector<8x128xf32>
    %3 = tpu.matmul %2, %1, %cst {dimension_numbers = #tpu.dot_dimension_numbers<[1], [0], [0], [1], [0, 0, 1, 1], [], []>} : vector<8x16xf32>, vector<16x128xf32>, vector<8x128xf32> -> vector<8x128xf32>
    %c0_4 = arith.constant 0 : index
    %c0_5 = arith.constant 0 : index
    %4 = vector.load %arg3[%c0_4, %c0_5] : memref<8x1xf32, #tpu.memory_space<vmem>>, vector<8x1xf32>
    %5 = vector.broadcast %4 : vector<8x1xf32> to vector<8x128xf32>
    %6 = arith.addf %3, %5 : vector<8x128xf32>
    %cst_6 = arith.constant 0.000000e+00 : f32
    %7 = vector.broadcast %cst_6 : f32 to vector<8x128xf32>
    %8 = arith.maximumf %6, %7 : vector<8x128xf32>
    %cst_7 = arith.constant 0.000000e+00 : f32
    %9 = vector.broadcast %cst_7 : f32 to vector<8x1xf32>
    %10 = tpu.concatenate %9, %8, %9 in 1 : vector<8x1xf32>, vector<8x128xf32>, vector<8x1xf32> -> vector<8x130xf32>
    %11 = vector.extract_strided_slice %10 {offsets = [0, 0], sizes = [8, 128], strides = [1, 1]} : vector<8x130xf32> to vector<8x128xf32>
    %12 = vector.extract_strided_slice %10 {offsets = [0, 1], sizes = [8, 128], strides = [1, 1]} : vector<8x130xf32> to vector<8x128xf32>
    %13 = vector.extract_strided_slice %10 {offsets = [0, 2], sizes = [8, 128], strides = [1, 1]} : vector<8x130xf32> to vector<8x128xf32>
    %14 = tpu.concatenate %11, %12, %13 in 0 : vector<8x128xf32>, vector<8x128xf32>, vector<8x128xf32> -> vector<24x128xf32>
    %c0_8 = arith.constant 0 : index
    %c0_9 = arith.constant 0 : index
    %15 = vector.load %arg4[%c0_8, %c0_9] : memref<16x24xf32, #tpu.memory_space<vmem>>, vector<16x24xf32>
    %cst_10 = arith.constant dense<0.000000e+00> : vector<16x128xf32>
    %16 = tpu.matmul %15, %14, %cst_10 {dimension_numbers = #tpu.dot_dimension_numbers<[1], [0], [0], [1], [0, 0, 1, 1], [], []>} : vector<16x24xf32>, vector<24x128xf32>, vector<16x128xf32> -> vector<16x128xf32>
    %c0_11 = arith.constant 0 : index
    %c0_12 = arith.constant 0 : index
    %17 = vector.load %arg5[%c0_11, %c0_12] : memref<16x1xf32, #tpu.memory_space<vmem>>, vector<16x1xf32>
    %18 = vector.broadcast %17 : vector<16x1xf32> to vector<16x128xf32>
    %19 = arith.addf %16, %18 : vector<16x128xf32>
    %cst_13 = arith.constant 0.000000e+00 : f32
    %20 = vector.broadcast %cst_13 : f32 to vector<16x128xf32>
    %21 = arith.maximumf %19, %20 : vector<16x128xf32>
    %22 = arith.addf %1, %21 : vector<16x128xf32>
    %c0_14 = arith.constant 0 : index
    %c0_15 = arith.constant 0 : index
    %c0_16 = arith.constant 0 : index
    %23 = vector.load %arg6[%c0_14, %c0_15, %c0_16] : memref<1x16x128xf32, #tpu.memory_space<vmem>>, vector<1x16x128xf32>
    %24 = vector.shape_cast %23 : vector<1x16x128xf32> to vector<16x128xf32>
    %25 = vector.shape_cast %22 : vector<16x128xf32> to vector<1x16x128xf32>
    tpu.vector_store %arg6[%c0_14, %c0_15, %c0_16], %25 {strides = array<i32>} : memref<1x16x128xf32, #tpu.memory_space<vmem>>, vector<1x16x128xf32>,
    return
  }
  func.func @transform_0(%arg0: i32) -> (i32, i32, i32) {
    %c0_i32 = arith.constant 0 : i32
    %c0_i32_0 = arith.constant 0 : i32
    %c0_i32_1 = arith.constant 0 : i32
    return %arg0, %c0_i32, %c0_i32_0 : i32, i32, i32
  }
  func.func @transform_1(%arg0: i32) -> (i32, i32) {
    %c0_i32 = arith.constant 0 : i32
    %c0_i32_0 = arith.constant 0 : i32
    %c0_i32_1 = arith.constant 0 : i32
    return %c0_i32, %c0_i32_0 : i32, i32
  }
  func.func @transform_2(%arg0: i32) -> (i32, i32) {
    %c0_i32 = arith.constant 0 : i32
    %c0_i32_0 = arith.constant 0 : i32
    %c0_i32_1 = arith.constant 0 : i32
    return %c0_i32, %c0_i32_0 : i32, i32
  }
  func.func @transform_3(%arg0: i32) -> (i32, i32) {
    %c0_i32 = arith.constant 0 : i32
    %c0_i32_0 = arith.constant 0 : i32
    %c0_i32_1 = arith.constant 0 : i32
    return %c0_i32, %c0_i32_0 : i32, i32
  }
  func.func @transform_4(%arg0: i32) -> (i32, i32) {
    %c0_i32 = arith.constant 0 : i32
    %c0_i32_0 = arith.constant 0 : i32
    %c0_i32_1 = arith.constant 0 : i32
    return %c0_i32, %c0_i32_0 : i32, i32
  }
  func.func @transform_5(%arg0: i32) -> (i32, i32, i32) {
    %c0_i32 = arith.constant 0 : i32
    %c0_i32_0 = arith.constant 0 : i32
    %c0_i32_1 = arith.constant 0 : i32
    return %arg0, %c0_i32, %c0_i32_0 : i32, i32, i32
  }
}

</mosaic_0001>

<llo_original>
// kernel: tpu_custom_call.1
$region0: #{tpu_custom_call.1}
  #allocation0 [shape = 'u32[]', space=smem, size = 0x4, offset = 0x4, fixed_abs, tag = 'smem constant byte address 0x4 - core index']
  #allocation1 [shape = 'u32[144,128]{1,0:T(1,128)}', space=vmem, size = 0x12000, scoped, tag = 'internal scratch']
  %s0 = inlined_call_operand.hbm [shape: f32[2,16,128], index: 0, kind: input, shape index: {}]
  %s1 = inlined_call_operand.vmem [shape: f32[8,16], index: 1, kind: input, shape index: {}]
  %s2 = inlined_call_operand.vmem [shape: f32[8,1], index: 2, kind: input, shape index: {}]
  %s3 = inlined_call_operand.vmem [shape: f32[16,24], index: 3, kind: input, shape index: {}]
  %s4 = inlined_call_operand.vmem [shape: f32[16,1], index: 4, kind: input, shape index: {}]
  %s5 = inlined_call_operand.hbm [shape: f32[2,16,128], index: 5, kind: output, shape index: {}]
  %s6 = sld [smem:[#allocation0]]
  $region57: #{tpu_custom_call.1} parent=0
    _
  %s8 = ssub.s32 1, %s6
  %s9 = scalar_select 0, %s8, %s6
  $region1: #{tpu_custom_call.1} parent=0
    #allocation2 [shape = 'u8[16384]{0}', space=vmem, size = 0x4000, scoped, tag = 'input window, operand 0']
    #allocation3 [shape = 's32[2]{0}', space=sflag, size = 0x8, scoped, tag = 'scoped memory for tpu_custom_call.1']
    #allocation4 [shape = 's32[2]{0}', space=sflag, size = 0x8, scoped, tag = 'scoped memory for tpu_custom_call.1']
    #allocation5 [shape = 'u8[16384]{0}', space=vmem, size = 0x4000, scoped, tag = 'output window, operand 0']
    %10 = vsyncpa [#allocation3], 0
    %s11 = scalar_lea.sflag [#allocation3], 1
    %12 = vsyncpa %s11, 0
    %13 = vsyncpa [#allocation4], 0
    %s14 = scalar_lea.sflag [#allocation4], 1
    %15 = vsyncpa %s14, 0
    loop: start=0, step=1, limit=4
    $region2: #{tpu_custom_call.1} parent=1 // loop_pre_header
      _
    $region3: #{tpu_custom_call.1} parent=1 // loop_header
      %s17 = sphi 0, %s21
      %p18 = scmp.ge.s32.totalorder %s17, 4
      %s27 = sphi 0, %s29
      %s30 = sphi 0, %s27
      %s31 = sphi 0, %s30
      %s47 = sphi 0, %s31
      %s51 = sphi 0, %s51
      %s53 = sphi 0, %s51
      %s54 = sphi 0, %s53
      %s68 = sphi 0, %s54
      %s72 = sphi 0, %s72
      %s74 = sphi 0, %s72
      %s75 = sphi 0, %s74
      %s89 = sphi 0, %s75
      %s93 = sphi 0, %s93
      %s95 = sphi 0, %s93
      %s96 = sphi 0, %s95
      %s110 = sphi 0, %s96
      %s114 = sphi 0, %s114
      %s116 = sphi 0, %s114
      %s117 = sphi 0, %s116
      %s131 = sphi 0, %s117
      %s137 = sphi 0, %s139
      %s140 = sphi 0, %s137
      %s141 = sphi 0, %s140
      %s157 = sphi 0, %s141
    $region4: #{tpu_custom_call.1} parent=1 // loop_header_branch
      %20 = sbr.rel (%p18) target = $region8
    $region5: #{tpu_custom_call.1} parent=1 // loop_body
      %s22 = ssub.s32 %s17, 1
      %s23 = ssub.s32 %s17, 2
      %s24 = sadd.s32 %s17, 1
      %s25 = ssub.s32 %s17, %s24
      %p26 = scmp.eq.s32.totalorder %s25, 0
      %s28 = sadd.s32 %s27, 1
      %s29 = scalar_select %p26, %s27, %s28
      %p32 = pneg %p26
      %p33 = scmp.eq.s32.totalorder %s17, 1
      %p34 = por %p32, %p33
      %p35 = scmp.ne.s32.totalorder %s27, %s30
      %p36 = scmp.eq.s32.totalorder %s17, 0
      %p37 = por %p35, %p36
      %p38 = scmp.ne.s32.totalorder %s27, %s30
      %p39 = scmp.eq.s32.totalorder %s22, 1
      %p40 = por %p38, %p39
      %p41 = scmp.ne.s32.totalorder %s30, %s31
      %p42 = scmp.eq.s32.totalorder %s22, 0
      %p43 = por %p41, %p42
      %p44 = scmp.ne.s32.totalorder %s30, %s31
      %p45 = scmp.eq.s32.totalorder %s23, 1
      %p46 = por %p44, %p45
      %p48 = scmp.ne.s32.totalorder %s31, %s47
      %p49 = scmp.eq.s32.totalorder %s23, 0
      %p50 = por %p48, %p49
      %s52 = sadd.s32 %s51, 1
      %p55 = scmp.eq.s32.totalorder %s17, 1
      %p56 = scmp.ne.s32.totalorder %s51, %s53
      %p57 = scmp.eq.s32.totalorder %s17, 0
      %p58 = por %p56, %p57
      %p59 = scmp.ne.s32.totalorder %s51, %s53
      %p60 = scmp.eq.s32.totalorder %s22, 1
      %p61 = por %p59, %p60
      %p62 = scmp.ne.s32.totalorder %s53, %s54
      %p63 = scmp.eq.s32.totalorder %s22, 0
      %p64 = por %p62, %p63
      %p65 = scmp.ne.s32.totalorder %s53, %s54
      %p66 = scmp.eq.s32.totalorder %s23, 1
      %p67 = por %p65, %p66
      %p69 = scmp.ne.s32.totalorder %s54, %s68
      %p70 = scmp.eq.s32.totalorder %s23, 0
      %p71 = por %p69, %p70
      %s73 = sadd.s32 %s72, 1
      %p76 = scmp.eq.s32.totalorder %s17, 1
      %p77 = scmp.ne.s32.totalorder %s72, %s74
      %p78 = scmp.eq.s32.totalorder %s17, 0
      %p79 = por %p77, %p78
      %p80 = scmp.ne.s32.totalorder %s72, %s74
      %p81 = scmp.eq.s32.totalorder %s22, 1
      %p82 = por %p80, %p81
      %p83 = scmp.ne.s32.totalorder %s74, %s75
      %p84 = scmp.eq.s32.totalorder %s22, 0
      %p85 = por %p83, %p84
      %p86 = scmp.ne.s32.totalorder %s74, %s75
      %p87 = scmp.eq.s32.totalorder %s23, 1
      %p88 = por %p86, %p87
      %p90 = scmp.ne.s32.totalorder %s75, %s89
      %p91 = scmp.eq.s32.totalorder %s23, 0
      %p92 = por %p90, %p91
      %s94 = sadd.s32 %s93, 1
      %p97 = scmp.eq.s32.totalorder %s17, 1
      %p98 = scmp.ne.s32.totalorder %s93, %s95
      %p99 = scmp.eq.s32.totalorder %s17, 0
      %p100 = por %p98, %p99
      %p101 = scmp.ne.s32.totalorder %s93, %s95
      %p102 = scmp.eq.s32.totalorder %s22, 1
      %p103 = por %p101, %p102
      %p104 = scmp.ne.s32.totalorder %s95, %s96
      %p105 = scmp.eq.s32.totalorder %s22, 0
      %p106 = por %p104, %p105
      %p107 = scmp.ne.s32.totalorder %s95, %s96
      %p108 = scmp.eq.s32.totalorder %s23, 1
      %p109 = por %p107, %p108
      %p111 = scmp.ne.s32.totalorder %s96, %s110
      %p112 = scmp.eq.s32.totalorder %s23, 0
      %p113 = por %p111, %p112
      %s115 = sadd.s32 %s114, 1
      %p118 = scmp.eq.s32.totalorder %s17, 1
      %p119 = scmp.ne.s32.totalorder %s114, %s116
      %p120 = scmp.eq.s32.totalorder %s17, 0
      %p121 = por %p119, %p120
      %p122 = scmp.ne.s32.totalorder %s114, %s116
      %p123 = scmp.eq.s32.totalorder %s22, 1
      %p124 = por %p122, %p123
      %p125 = scmp.ne.s32.totalorder %s116, %s117
      %p126 = scmp.eq.s32.totalorder %s22, 0
      %p127 = por %p125, %p126
      %p128 = scmp.ne.s32.totalorder %s116, %s117
      %p129 = scmp.eq.s32.totalorder %s23, 1
      %p130 = por %p128, %p129
      %p132 = scmp.ne.s32.totalorder %s117, %s131
      %p133 = scmp.eq.s32.totalorder %s23, 0
      %p134 = por %p132, %p133
      %s135 = ssub.s32 %s17, %s24
      %p136 = scmp.eq.s32.totalorder %s135, 0
      %s138 = sadd.s32 %s137, 1
      %s139 = scalar_select %p136, %s137, %s138
      %p142 = pneg %p136
      %p143 = scmp.eq.s32.totalorder %s17, 1
      %p144 = por %p142, %p143
      %p145 = scmp.ne.s32.totalorder %s137, %s140
      %p146 = scmp.eq.s32.totalorder %s17, 0
      %p147 = por %p145, %p146
      %p148 = scmp.ne.s32.totalorder %s137, %s140
      %p149 = scmp.eq.s32.totalorder %s22, 1
      %p150 = por %p148, %p149
      %p151 = scmp.ne.s32.totalorder %s140, %s141
      %p152 = scmp.eq.s32.totalorder %s22, 0
      %p153 = por %p151, %p152
      %p154 = scmp.ne.s32.totalorder %s140, %s141
      %p155 = scmp.eq.s32.totalorder %s23, 1
      %p156 = por %p154, %p155
      %p158 = scmp.ne.s32.totalorder %s141, %s157
      %p159 = scmp.eq.s32.totalorder %s23, 0
      %p160 = por %p158, %p159
      %p161 = scmp.le.s32.totalorder 1, %s17
      %p162 = scmp.lt.s32.totalorder %s17, 3
      %p163 = pnand %p161, %p162
      %p164 = pneg %p163
      // Predicated region
      $region9: #{tpu_custom_call.1} parent=5 // pred_check
        _
      $region10: #{tpu_custom_call.1} parent=5 // pred_check_branch
        %166 = sbr.rel (%p163) target = $region12
      $region11: #{tpu_custom_call.1} parent=5 // pred_region
        %s167 = ssub.s32 %s17, 1
        // Predicated region
        $region13: #{tpu_custom_call.1} parent=11 // pred_check
          %p168 = pneg %p64
        $region14: #{tpu_custom_call.1} parent=11 // pred_check_branch
          %170 = sbr.rel (%p168) target = $region16
        $region15: #{tpu_custom_call.1} parent=11 // pred_region
          _
        $region16: #{tpu_custom_call.1} parent=11 // pred_fallthru
          _
        // Predicated region
        $region17: #{tpu_custom_call.1} parent=11 // pred_check
          %p171 = pneg %p85
        $region18: #{tpu_custom_call.1} parent=11 // pred_check_branch
          %173 = sbr.rel (%p171) target = $region20
        $region19: #{tpu_custom_call.1} parent=11 // pred_region
          _
        $region20: #{tpu_custom_call.1} parent=11 // pred_fallthru
          _
        // Predicated region
        $region21: #{tpu_custom_call.1} parent=11 // pred_check
          %p174 = pneg %p106
        $region22: #{tpu_custom_call.1} parent=11 // pred_check_branch
          %176 = sbr.rel (%p174) target = $region24
        $region23: #{tpu_custom_call.1} parent=11 // pred_region
          _
        $region24: #{tpu_custom_call.1} parent=11 // pred_fallthru
          _
        // Predicated region
        $region25: #{tpu_custom_call.1} parent=11 // pred_check
          %p177 = pneg %p127
        $region26: #{tpu_custom_call.1} parent=11 // pred_check_branch
          %179 = sbr.rel (%p177) target = $region28
        $region27: #{tpu_custom_call.1} parent=11 // pred_region
          _
        $region28: #{tpu_custom_call.1} parent=11 // pred_fallthru
          _
      $region12: #{tpu_custom_call.1} parent=5 // pred_fallthru
        _
      %p180 = scmp.lt.s32.totalorder %s17, 2
      // Predicated region
      $region29: #{tpu_custom_call.1} parent=5 // pred_check
        %p181 = pneg %p180
      $region30: #{tpu_custom_call.1} parent=5 // pred_check_branch
        %183 = sbr.rel (%p181) target = $region32
      $region31: #{tpu_custom_call.1} parent=5 // pred_region
        // Predicated region
        $region33: #{tpu_custom_call.1} parent=31 // pred_check
          %p184 = pneg %p37
        $region34: #{tpu_custom_call.1} parent=31 // pred_check_branch
          %186 = sbr.rel (%p184) target = $region36
        $region35: #{tpu_custom_call.1} parent=31 // pred_region
          %s187 = sand.u32 %s27, 1
          %s188 = scalar_lea.sflag [#allocation3], %s187
          %s189 = sand.u32 %s27, 1
          %s190 = smul.addr %s189, 16
          %s191 = scalar_lea.vmem [#allocation2], %s190
          %s193 = ssub.s32 256, 256
          %194 = vsyncadd %s188, %s193
          %s195 = smul.addr %s17, 2
          %s196 = smul.addr %s195, 128
          %s197 = scalar_lea.hbm %s0, %s196
          %s198 = sshll.u32 %s191, 4
          %s199 = int_to_ptr.vmem [resolvable:$true] %s198
          %204 = dma.hbm_to_vmem [thread:$0]  %s197, 256, %s199, %s188, 128, 128, 8
        $region36: #{tpu_custom_call.1} parent=31 // pred_fallthru
          _
      $region32: #{tpu_custom_call.1} parent=5 // pred_fallthru
        _
      %p205 = scmp.le.s32.totalorder 1, %s17
      %p206 = scmp.lt.s32.totalorder %s17, 3
      %p207 = pnand %p205, %p206
      %p208 = pneg %p207
      // Predicated region
      $region37: #{tpu_custom_call.1} parent=5 // pred_check
        _
      $region38: #{tpu_custom_call.1} parent=5 // pred_check_branch
        %210 = sbr.rel (%p207) target = $region40
      $region39: #{tpu_custom_call.1} parent=5 // pred_region
        %s211 = ssub.s32 %s17, 1
        %s212 = sand.u32 %s30, 1
        %s213 = scalar_lea.sflag [#allocation3], %s212
        %s214 = sand.u32 %s30, 1
        %s215 = smul.addr %s214, 16
        %s216 = scalar_lea.vmem [#allocation2], %s215
        // Predicated region
        $region41: #{tpu_custom_call.1} parent=39 // pred_check
          %p217 = pneg %p43
        $region42: #{tpu_custom_call.1} parent=39 // pred_check_branch
          %219 = sbr.rel (%p217) target = $region44
        $region43: #{tpu_custom_call.1} parent=39 // pred_region
          %220 = dma.done %s213, 256
        $region44: #{tpu_custom_call.1} parent=39 // pred_fallthru
          _
        %s221 = sand.u32 %s30, 1
        %s222 = scalar_lea.sflag [#allocation3], %s221
        %s223 = sand.u32 %s30, 1
        %s224 = smul.addr %s223, 16
        %s225 = scalar_lea.vmem [#allocation2], %s224
        %p226 = pneg %p43
        %p227 = pneg %p40
        %p228 = pneg %p64
        %p229 = pneg %p61
        %p230 = pneg %p85
        %p231 = pneg %p82
        %p232 = pneg %p106
        %p233 = pneg %p103
        %p234 = pneg %p127
        %p235 = pneg %p124
        %p236 = pneg %p153
        %p237 = pneg %p150
        %s238 = sand.u32 %s140, 1
        %s239 = scalar_lea.sflag [#allocation4], %s238
        %s240 = sand.u32 %s140, 1
        %s241 = smul.addr %s240, 16
        %s242 = scalar_lea.vmem [#allocation5], %s241
        %v243 = vld [vmem:[%s216] sm:$0xff]
        %v244 = vld [vmem:[%s216 + $0x8] sm:$0xff]
        %v245 = vld [vmem:[%s1] sm:$0xff]
        %v246 = vld [vmem:[%s2] sm:$0xff]
        %248 = vset.pattern.permute.xlu0 0
        %249 = vperm.xlu0 %248, %v246
        %v250 = vpop.permute.xlu0 %249
        %vm252 = vcmask 130048
        %v254 = vsel %vm252, %v245, 0
        %256 = vmatprep.subr.mxu0 0.0
        %257 = vmatpush1.msra.mxu0 %v243
        %258 = vmatprep.subr.mxu0 0.0
        %259 = vmatpush1.msra.mxu0 %v244
        %260 = vmatprep.subr.mxu0 0.0
        %261 = vmatpush1.msra.mxu0 0.0
        %262 = vmatprep.subr.mxu0 0.0
        %263 = vmatpush1.msra.mxu0 0.0
        %264 = vmatprep.subr.mxu0 0.0
        %265 = vmatpush1.msra.mxu0 0.0
        %266 = vmatprep.subr.mxu0 0.0
        %267 = vmatpush1.msra.mxu0 0.0
        %268 = vmatprep.subr.mxu0 0.0
        %269 = vmatpush1.msra.mxu0 0.0
        %270 = vmatprep.subr.mxu0 0.0
        %271 = vmatpush1.msra.mxu0 0.0
        %272 = vmatprep.subr.mxu0 0.0
        %273 = vmatpush1.msra.mxu0 0.0
        %274 = vmatprep.subr.mxu0 0.0
        %275 = vmatpush1.msra.mxu0 0.0
        %276 = vmatprep.subr.mxu0 0.0
        %277 = vmatpush1.msra.mxu0 0.0
        %278 = vmatprep.subr.mxu0 0.0
        %279 = vmatpush1.msra.mxu0 0.0
        %280 = vmatprep.subr.mxu0 0.0
        %281 = vmatpush1.msra.mxu0 0.0
        %282 = vmatprep.subr.mxu0 0.0
        %283 = vmatpush1.msra.mxu0 0.0
        %284 = vmatprep.subr.mxu0 0.0
        %285 = vmatpush1.msra.mxu0 0.0
        %286 = vmatprep.subr.mxu0 0.0
        %287 = vmatpush1.msra.mxu0 0.0
        %288 = vmatprep.subr.mxu0 0.0
        %289 = vmatpush1.msra.mxu0 0.0
        %290 = vmatprep.subr.mxu0 0.0
        %291 = vmatpush1.msra.mxu0 0.0
        %292 = vmatprep.subr.mxu0 0.0
        %293 = vmatpush1.msra.mxu0 0.0
        %294 = vmatprep.subr.mxu0 0.0
        %295 = vmatpush1.msra.mxu0 0.0
        %296 = vmatprep.subr.mxu0 0.0
        %297 = vmatpush1.msra.mxu0 0.0
        %298 = vmatprep.subr.mxu0 0.0
        %299 = vmatpush1.msra.mxu0 0.0
        %300 = vmatprep.subr.mxu0 0.0
        %301 = vmatpush1.msra.mxu0 0.0
        %302 = vmatprep.subr.mxu0 0.0
        %303 = vmatpush1.msra.mxu0 0.0
        %304 = vmatprep.subr.mxu0 0.0
        %305 = vmatpush1.msra.mxu0 0.0
        %306 = vmatprep.subr.mxu0 0.0
        %307 = vmatpush1.msra.mxu0 0.0
        %308 = vmatprep.subr.mxu0 0.0
        %309 = vmatpush1.msra.mxu0 0.0
        %310 = vmatprep.subr.mxu0 0.0
        %311 = vmatpush1.msra.mxu0 0.0
        %312 = vmatprep.subr.mxu0 0.0
        %313 = vmatpush1.msra.mxu0 0.0
        %314 = vmatprep.subr.mxu0 0.0
        %315 = vmatpush1.msra.mxu0 0.0
        %316 = vmatprep.subr.mxu0 0.0
        %317 = vmatpush1.msra.mxu0 0.0
        %318 = vmatprep.subr.mxu0 0.0
        %319 = vmatpush1.msra.mxu0 0.0
        %320 = vmatprep.mubr.f32.mxu0 0.0
        %321 = vmatmul.mubr.f32.gmra.mrb[0].mxu0 %v254
        %v322 = vpop.f32.mrb[0].mxu0
        %v323 = vadd.f32 %v250, %v322
        %v324 = vpop.f32.mrb[0].mxu0
        %325 = vdwg.mxu0
        %v326 = vmax.f32 %v323, 0.0
        %328 = vrot.lane.b32.xlu0 %v326, 1
        %v329 = vpop.permute.xlu0 %328
        %vm331 = vcmask 7168
        %v332 = vsel %vm331, 0.0, %v329
        %v333 = vsel %vm331, %v329, 0.0
        %336 = vrot.lane.b32.xlu0 %v332, 127
        %v337 = vpop.permute.xlu0 %336
        %338 = vrot.lane.b32.xlu0 %v333, 127
        %v339 = vpop.permute.xlu0 %338
        %vm340 = vcmask 1039360
        %v341 = vsel %vm340, %v337, %v339
        %343 = vrot.lane.b32.xlu0 %v332, 126
        %v344 = vpop.permute.xlu0 %343
        %345 = vrot.lane.b32.xlu0 %v333, 126
        %v346 = vpop.permute.xlu0 %345
        %vm347 = vcmask 1031168
        %v348 = vsel %vm347, %v344, %v346
        %v350 = vld [vmem:[%s3] sm:$0xff]
        %v351 = vld [vmem:[%s3 + $0x8] sm:$0xff]
        %v352 = vld [vmem:[%s4] sm:$0xff]
        %v353 = vld [vmem:[%s4 + $0x8] sm:$0xff]
        %355 = vset.pattern.permute.xlu0 0
        %356 = vperm.xlu0 %355, %v352
        %v357 = vpop.permute.xlu0 %356
        %360 = vset.pattern.permute.xlu0 0
        %361 = vperm.xlu0 %360, %v353
        %v362 = vpop.permute.xlu0 %361
        %vm364 = vcmask 195584
        %v366 = vsel %vm364, %v350, 0
        %v369 = vsel %vm364, %v351, 0
        %371 = vmatprep.subr.mxu0 0.0
        %372 = vmatpush1.msra.mxu0 %v332
        %373 = vmatprep.subr.mxu0 0.0
        %374 = vmatpush1.msra.mxu0 %v341
        %375 = vmatprep.subr.mxu0 0.0
        %376 = vmatpush1.msra.mxu0 %v348
        %377 = vmatprep.subr.mxu0 0.0
        %378 = vmatpush1.msra.mxu0 0.0
        %379 = vmatprep.subr.mxu0 0.0
        %380 = vmatpush1.msra.mxu0 0.0
        %381 = vmatprep.subr.mxu0 0.0
        %382 = vmatpush1.msra.mxu0 0.0
        %383 = vmatprep.subr.mxu0 0.0
        %384 = vmatpush1.msra.mxu0 0.0
        %385 = vmatprep.subr.mxu0 0.0
        %386 = vmatpush1.msra.mxu0 0.0
        %387 = vmatprep.subr.mxu0 0.0
        %388 = vmatpush1.msra.mxu0 0.0
        %389 = vmatprep.subr.mxu0 0.0
        %390 = vmatpush1.msra.mxu0 0.0
        %391 = vmatprep.subr.mxu0 0.0
        %392 = vmatpush1.msra.mxu0 0.0
        %393 = vmatprep.subr.mxu0 0.0
        %394 = vmatpush1.msra.mxu0 0.0
        %395 = vmatprep.subr.mxu0 0.0
        %396 = vmatpush1.msra.mxu0 0.0
        %397 = vmatprep.subr.mxu0 0.0
        %398 = vmatpush1.msra.mxu0 0.0
        %399 = vmatprep.subr.mxu0 0.0
        %400 = vmatpush1.msra.mxu0 0.0
        %401 = vmatprep.subr.mxu0 0.0
        %402 = vmatpush1.msra.mxu0 0.0
        %403 = vmatprep.subr.mxu0 0.0
        %404 = vmatpush1.msra.mxu0 0.0
        %405 = vmatprep.subr.mxu0 0.0
        %406 = vmatpush1.msra.mxu0 0.0
        %407 = vmatprep.subr.mxu0 0.0
        %408 = vmatpush1.msra.mxu0 0.0
        %409 = vmatprep.subr.mxu0 0.0
        %410 = vmatpush1.msra.mxu0 0.0
        %411 = vmatprep.subr.mxu0 0.0
        %412 = vmatpush1.msra.mxu0 0.0
        %413 = vmatprep.subr.mxu0 0.0
        %414 = vmatpush1.msra.mxu0 0.0
        %415 = vmatprep.subr.mxu0 0.0
        %416 = vmatpush1.msra.mxu0 0.0
        %417 = vmatprep.subr.mxu0 0.0
        %418 = vmatpush1.msra.mxu0 0.0
        %419 = vmatprep.subr.mxu0 0.0
        %420 = vmatpush1.msra.mxu0 0.0
        %421 = vmatprep.subr.mxu0 0.0
        %422 = vmatpush1.msra.mxu0 0.0
        %423 = vmatprep.subr.mxu0 0.0
        %424 = vmatpush1.msra.mxu0 0.0
        %425 = vmatprep.subr.mxu0 0.0
        %426 = vmatpush1.msra.mxu0 0.0
        %427 = vmatprep.subr.mxu0 0.0
        %428 = vmatpush1.msra.mxu0 0.0
        %429 = vmatprep.subr.mxu0 0.0
        %430 = vmatpush1.msra.mxu0 0.0
        %431 = vmatprep.subr.mxu0 0.0
        %432 = vmatpush1.msra.mxu0 0.0
        %433 = vmatprep.subr.mxu0 0.0
        %434 = vmatpush1.msra.mxu0 0.0
        %435 = vmatprep.mubr.f32.mxu0 0.0
        %436 = vmatmul.mubr.f32.gmra.mrb[0].mxu0 %v366
        %v437 = vpop.f32.mrb[0].mxu0
        %v438 = vadd.f32 %v357, %v437
        %v439 = vpop.f32.mrb[0].mxu0
        %440 = vmatprep.mubr.f32.mxu0 0.0
        %441 = vmatmul.mubr.f32.gmra.mrb[0].mxu0 %v369
        %v442 = vpop.f32.mrb[0].mxu0
        %v443 = vadd.f32 %v362, %v442
        %v444 = vpop.f32.mrb[0].mxu0
        %445 = vdwg.mxu0
        %v446 = vmax.f32 %v438, 0.0
        %v447 = vmax.f32 %v443, 0.0
        %v448 = vadd.f32 %v243, %v446
        %v449 = vadd.f32 %v244, %v447
        %450 = vst [vmem:[%s242] sm:$0xff] %v448
        %451 = vst [vmem:[%s242 + $0x8] sm:$0xff] %v449
        %s452 = sand.u32 %s140, 1
        %s453 = scalar_lea.sflag [#allocation4], %s452
        %s454 = sand.u32 %s140, 1
        %s455 = smul.addr %s454, 16
        %s456 = scalar_lea.vmem [#allocation5], %s455
        // Predicated region
        $region45: #{tpu_custom_call.1} parent=39 // pred_check
          %p457 = pneg %p150
        $region46: #{tpu_custom_call.1} parent=39 // pred_check_branch
          %459 = sbr.rel (%p457) target = $region48
        $region47: #{tpu_custom_call.1} parent=39 // pred_region
          %s461 = ssub.s32 256, 256
          %462 = vsyncadd %s453, %s461
          %s463 = smul.addr %s22, 2
          %s464 = smul.addr %s463, 128
          %s465 = scalar_lea.hbm %s5, %s464
          %s466 = sshll.u32 %s456, 4
          %s467 = int_to_ptr.vmem [resolvable:$true] %s466
          %472 = dma.vmem_to_hbm [thread:$0]  %s467, 256, %s465, %s453, 128, 128, 8
        $region48: #{tpu_custom_call.1} parent=39 // pred_fallthru
          _
      $region40: #{tpu_custom_call.1} parent=5 // pred_fallthru
        _
      %p473 = scmp.le.s32.totalorder 2, %s17
      // Predicated region
      $region49: #{tpu_custom_call.1} parent=5 // pred_check
        %p474 = pneg %p473
      $region50: #{tpu_custom_call.1} parent=5 // pred_check_branch
        %476 = sbr.rel (%p474) target = $region52
      $region51: #{tpu_custom_call.1} parent=5 // pred_region
        %s477 = ssub.s32 %s17, 2
        // Predicated region
        $region53: #{tpu_custom_call.1} parent=51 // pred_check
          %p478 = pneg %p156
        $region54: #{tpu_custom_call.1} parent=51 // pred_check_branch
          %480 = sbr.rel (%p478) target = $region56
        $region55: #{tpu_custom_call.1} parent=51 // pred_region
          %s481 = sand.u32 %s141, 1
          %s482 = scalar_lea.sflag [#allocation4], %s481
          %s483 = sand.u32 %s141, 1
          %s484 = smul.addr %s483, 16
          %s485 = scalar_lea.vmem [#allocation5], %s484
          %486 = dma.done %s482, 256
        $region56: #{tpu_custom_call.1} parent=51 // pred_fallthru
          _
      $region52: #{tpu_custom_call.1} parent=5 // pred_fallthru
        _
    $region6: #{tpu_custom_call.1} parent=1 // loop_footer
      %s21 = sadd.s32 1, %s17
    $region7: #{tpu_custom_call.1} parent=1 // loop_footer_branch
      %16 = sbr.rel target = $region3
    $region8: #{tpu_custom_call.1} parent=1 // loop_exit
      _
    %487 = vsyncpa [#allocation3], 1
    %s488 = scalar_lea.sflag [#allocation3], 1
    %489 = vsyncpa %s488, 1
    %490 = vsyncpa [#allocation4], 1
    %s491 = scalar_lea.sflag [#allocation4], 1
    %492 = vsyncpa %s491, 1

</llo_original>
